<compile_context>
chip_gen: v7x
topology: tpu7x:2x2x1
jax: 0.10.0
libtpu: 0.0.40
codegen_flags: <defaults>
</compile_context>

<pallas_src>
import functools
import math

import jax
import jax.numpy as jnp
from jax.experimental import pallas as pl
from jax.experimental.pallas import tpu as pltpu


def _glimpse_kernel(ref_ref, wt_ref, v_ref, out_ref, *, n_valid):
    # ref_ref: (Bt, N, in_dim); wt_ref: (in_dim, out_dim); v_ref: (1, 1, out_dim) f32
    # out_ref: (Bt, in_dim)
    Bt, N, in_dim = ref_ref.shape
    out_dim = wt_ref.shape[1]

    x3 = ref_ref[...]                                  # (Bt, N, in_dim), input dtype
    x2 = x3.reshape(Bt * N, in_dim)                    # layout-free: N % 8 == 0 (wrapper)

    # Dense layer: one big MXU matmul per grid step, f32 accumulation.
    enc = jnp.dot(x2, wt_ref[...], preferred_element_type=jnp.float32)  # (Bt*N, out_dim)
    t3 = jnp.tanh(enc).reshape(Bt, N, out_dim)         # EUP tanh, f32
    # TODO(synk): if the bundle dump shows the EUP slot binding on v6e/v7x, cast enc
    # to bf16 before tanh (not on v5e: no bf16 EUP).

    # scores[b, n] = sum_o v[o] * tanh(enc[b, n, o]).
    # VPU multiply (implicit stride-0 broadcast of the single v row) + lane reduce;
    # avoids the degenerate M=1 batched MXU matmul and the Bt-wide broadcast of v.
    v_row = v_ref[...]                                 # (1, 1, out_dim) f32
    scores = jnp.sum(t3 * v_row, axis=-1)              # (Bt, N) f32

    if n_valid < N:                                    # mask padded sequence positions
        pos = jax.lax.broadcasted_iota(jnp.int32, (Bt, N), 1)
        scores = jnp.where(pos < n_valid, scores, -jnp.inf)

    # Softmax over the sequence axis (lane axis). Exact normalization (f32 divide);
    # the approximate EUP reciprocal is what broke the 1e-3 tolerance previously.
    m = jnp.max(scores, axis=-1, keepdims=True)        # (Bt, 1)
    e = jnp.exp(scores - m)                            # (Bt, N)
    attn = e / jnp.sum(e, axis=-1, keepdims=True)      # (Bt, N) f32, sums to 1

    # Weighted sum back to in_dim.
    if N <= 64:
        # Small N: VPU broadcast-multiply + sublane reduce, fully in f32 (also avoids
        # rounding attn to bf16 when matmul_dtype=bf16).
        g = jnp.sum(x3.astype(jnp.float32) * attn[:, :, None], axis=1)     # (Bt, in_dim)
    else:
        # Large N: batched matmul on the MXU.
        g = jnp.einsum("bn,bnd->bd", attn.astype(x3.dtype), x3,
                       preferred_element_type=jnp.float32)                 # (Bt, in_dim)
    out_ref[...] = g.astype(out_ref.dtype)


def _round_up(x, m):
    return ((x + m - 1) // m) * m


def _select_bt(B, N_pad, in_pad, out_pad, itemsize, block_b):
    """Pick the batch tile Bt and estimate per-step VMEM need."""
    if block_b is not None:
        bt = max(8, _round_up(block_b, 8))
    else:
        bt_bytes = pl.cdiv(4 << 20, N_pad * in_pad * itemsize)   # ref tile ~4 MiB
        bt_rows = pl.cdiv(512, N_pad)                            # Bt*N >= 512 MXU rows
        bt = max(8, _round_up(max(bt_bytes, bt_rows), 8))
    bt = min(bt, _round_up(B, 8))

    def vmem_need(b):
        ref_tile = b * N_pad * in_pad * itemsize
        enc_tile = b * N_pad * out_pad * 4
        out_tile = b * in_pad * 4
        wt_bytes = in_pad * out_pad * itemsize
        return 2 * ref_tile + 3 * enc_tile + 2 * out_tile + 2 * wt_bytes + (1 << 20)

    # Shrink to a conservative budget so the tile also fits v7x's 64 MiB per-TC VMEM.
    while bt > 8 and vmem_need(bt) > (40 << 20):
        bt = max(8, _round_up(bt // 2, 8))
    return bt, vmem_need(bt)


def full_glimpse(ref, w, v, *, block_b=None, matmul_dtype=None):
    """FullGlimpse forward.

    Args:
      ref: (B, N, in_dim) input set.
      w:   (out_dim, in_dim) dense weight (PyTorch nn.Linear layout, no bias).
      v:   (out_dim,) attention vector.
      block_b: batch rows per grid step (multiple of 8). Default: auto-sized so the
        ref tile is ~4 MiB and Bt*N >= 512, shrunk to fit a 40 MiB VMEM budget.
        Keep B_pad//Bt >= 2 (ideally even) on v7x so both TensorCores get work.
      matmul_dtype: e.g. jnp.bfloat16 — recommended on v5e/v6e/v7x (the kernel is
        HBM-bound on the ref stream; accumulation stays f32). None keeps f32 inputs.
    """
    B, N, in_dim = ref.shape
    out_dim = w.shape[0]
    out_dtype = ref.dtype

    # Pad so in-kernel reshapes are layout-free and lanes are dense.
    N_pad = _round_up(N, 8)
    in_pad = _round_up(in_dim, 128)
    out_pad = _round_up(out_dim, 128)

    itemsize = jnp.dtype(matmul_dtype) .itemsize if matmul_dtype is not None \
        else jnp.dtype(ref.dtype).itemsize
    Bt, vmem_need = _select_bt(B, N_pad, in_pad, out_pad, itemsize, block_b)
    B_pad = _round_up(B, Bt)

    if (B_pad - B) or (N_pad - N) or (in_pad - in_dim):
        # Zero-padded rows/positions are masked (seq) or sliced off (batch, in_dim).
        ref = jnp.pad(ref, ((0, B_pad - B), (0, N_pad - N), (0, in_pad - in_dim)))

    wt = jnp.transpose(w)                              # (in_dim, out_dim): transpose ONCE
    if (in_pad - in_dim) or (out_pad - out_dim):
        wt = jnp.pad(wt, ((0, in_pad - in_dim), (0, out_pad - out_dim)))
    v_arr = v.astype(jnp.float32)                      # v stays f32 (VPU math)
    if out_pad - out_dim:
        v_arr = jnp.pad(v_arr, ((0, out_pad - out_dim),))
    v3 = v_arr.reshape(1, 1, out_pad)

    if matmul_dtype is not None:
        ref = ref.astype(matmul_dtype)
        wt = wt.astype(matmul_dtype)

    cost = pl.CostEstimate(
        flops=2 * B_pad * N_pad * (in_pad * out_pad + out_pad + in_pad),
        transcendentals=B_pad * N_pad * (out_pad + 1),          # tanh + exp
        bytes_accessed=(ref.size * ref.dtype.itemsize
                        + wt.size * wt.dtype.itemsize
                        + v3.size * v3.dtype.itemsize
                        + B_pad * in_pad * jnp.dtype(out_dtype).itemsize),
    )
    vmem_limit = int(min(56 << 20, max(32 << 20, vmem_need + (8 << 20))))

    kernel = functools.partial(_glimpse_kernel, n_valid=N)

    out = pl.pallas_call(
        kernel,
        out_shape=jax.ShapeDtypeStruct((B_pad, in_pad), out_dtype),
        grid_spec=pltpu.PrefetchScalarGridSpec(
            num_scalar_prefetch=0,
            grid=(B_pad // Bt,),
            in_specs=[
                pl.BlockSpec((Bt, N_pad, in_pad), lambda b: (b, 0, 0)),
                pl.BlockSpec((in_pad, out_pad), lambda b: (0, 0)),    # resident, DMA'd once
                pl.BlockSpec((1, 1, out_pad), lambda b: (0, 0, 0)),   # resident, DMA'd once
            ],
            out_specs=pl.BlockSpec((Bt, in_pad), lambda b: (b, 0)),
        ),
        compiler_params=pltpu.CompilerParams(
            dimension_semantics=("parallel",),
            vmem_limit_bytes=vmem_limit),
        cost_estimate=cost,
    )(ref, wt, v3)
    return out[:B, :in_dim]


def full_glimpse_ref(ref, w, v):
    """Pure-JAX reference mirroring the PyTorch forward."""
    enc = jnp.einsum("bnd,od->bno", ref, w)                 # dense (no bias)
    scores = jnp.sum(v * jnp.tanh(enc), axis=-1)            # (B, N)
    attn = jax.nn.softmax(scores, axis=-1)                  # (B, N)
    return jnp.sum(ref * attn[..., None], axis=1)           # (B, in_dim)


if __name__ == "__main__":
    # Small shapes consistent with the module: ref is (B, N, in_dim); module defaults
    # in_dim=128, out_dim=256.
    B, N, in_dim, out_dim = 16, 8, 128, 256

    key = jax.random.PRNGKey(0)
    k_ref, k_w, k_v = jax.random.split(key, 3)

    # Deterministic init mirroring the module's __init__ / reset_parameters:
    bound = 1.0 / math.sqrt(in_dim)
    w = jax.random.uniform(k_w, (out_dim, in_dim), jnp.float32, -bound, bound)
    v = jax.random.uniform(k_v, (out_dim,), jnp.float32, -bound, bound)
    ref = jax.random.normal(k_ref, (B, N, in_dim), jnp.float32)

    expected = full_glimpse_ref(ref, w, v)

    # f32 path (exact softmax normalization — tight tolerance).
    out = jax.block_until_ready(full_glimpse(ref, w, v))
    assert out.shape == (B, in_dim), out.shape
    max_err = float(jnp.max(jnp.abs(out - expected)))
    assert max_err < 1e-4, max_err

    # bf16-input path (f32 accumulation): looser tolerance for the bf16 ref/W rounding.
    out_bf16 = jax.block_until_ready(full_glimpse(ref, w, v, matmul_dtype=jnp.bfloat16))
    assert out_bf16.shape == (B, in_dim), out_bf16.shape
    max_err_bf16 = float(jnp.max(jnp.abs(out_bf16 - expected)))
    assert max_err_bf16 < 5e-2, max_err_bf16

    print("KERNEL_OK")
</pallas_src>

<mosaic_0001>
module attributes {stable_mosaic.version = 11 : i64} {
  func.func @_glimpse_kernel(%arg0: i32, %arg1: memref<16x8x128xf32, #tpu.memory_space<vmem>>, %arg2: memref<128x256xf32, #tpu.memory_space<vmem>>, %arg3: memref<1x1x256xf32, #tpu.memory_space<vmem>>, %arg4: memref<16x128xf32, #tpu.memory_space<vmem>>) attributes {dimension_semantics = [#tpu.dimension_semantics<parallel>], iteration_bounds = array<i64: 1>, scalar_prefetch = 0 : i64, scratch_operands = 0 : i64, tpu.core_type = #tpu.core_type<tc>, window_params = [{transform_indices = @transform_0, window_bounds = array<i64: 16, 8, 128>}, {pipeline_mode = #tpu.pipeline_mode<synchronous>, transform_indices = @transform_1, window_bounds = array<i64: 128, 256>}, {pipeline_mode = #tpu.pipeline_mode<synchronous>, transform_indices = @transform_2, window_bounds = array<i64: 1, 1, 256>}, {transform_indices = @transform_3, window_bounds = array<i64: 16, 128>}]} {
    %c0 = arith.constant 0 : index
    %c0_0 = arith.constant 0 : index
    %c0_1 = arith.constant 0 : index
    %0 = vector.load %arg1[%c0, %c0_0, %c0_1] : memref<16x8x128xf32, #tpu.memory_space<vmem>>, vector<16x8x128xf32>
    %1 = vector.shape_cast %0 : vector<16x8x128xf32> to vector<128x128xf32>
    %c0_2 = arith.constant 0 : index
    %c0_3 = arith.constant 0 : index
    %2 = vector.load %arg2[%c0_2, %c0_3] : memref<128x256xf32, #tpu.memory_space<vmem>>, vector<128x256xf32>
    %cst = arith.constant dense<0.000000e+00> : vector<128x256xf32>
    %3 = tpu.matmul %1, %2, %cst {dimension_numbers = #tpu.dot_dimension_numbers<[1], [0], [0], [1], [0, 0, 1, 1], [], []>} : vector<128x128xf32>, vector<128x256xf32>, vector<128x256xf32> -> vector<128x256xf32>
    %4 = math.tanh %3 : vector<128x256xf32>
    %5 = vector.shape_cast %4 : vector<128x256xf32> to vector<16x8x256xf32>
    %c0_4 = arith.constant 0 : index
    %c0_5 = arith.constant 0 : index
    %c0_6 = arith.constant 0 : index
    %6 = vector.load %arg3[%c0_4, %c0_5, %c0_6] : memref<1x1x256xf32, #tpu.memory_space<vmem>>, vector<1x1x256xf32>
    %7 = vector.broadcast %6 : vector<1x1x256xf32> to vector<16x8x256xf32>
    %8 = arith.mulf %5, %7 : vector<16x8x256xf32>
    %cst_7 = arith.constant dense<0.000000e+00> : vector<16x8xf32>
    %9 = vector.multi_reduction <add>, %8, %cst_7 [2] : vector<16x8x256xf32> to vector<16x8xf32>
    %cst_8 = arith.constant dense<0xFF800000> : vector<16xf32>
    %10 = vector.multi_reduction <maximumf>, %9, %cst_8 [1] : vector<16x8xf32> to vector<16xf32>
    %11 = vector.shape_cast %10 : vector<16xf32> to vector<16x1xf32>
    %12 = vector.broadcast %11 : vector<16x1xf32> to vector<16x8xf32>
    %13 = arith.subf %9, %12 : vector<16x8xf32>
    %14 = math.exp %13 : vector<16x8xf32>
    %cst_9 = arith.constant dense<0.000000e+00> : vector<16xf32>
    %15 = vector.multi_reduction <add>, %14, %cst_9 [1] : vector<16x8xf32> to vector<16xf32>
    %16 = vector.shape_cast %15 : vector<16xf32> to vector<16x1xf32>
    %17 = vector.broadcast %16 : vector<16x1xf32> to vector<16x8xf32>
    %18 = arith.divf %14, %17 : vector<16x8xf32>
    %19 = vector.shape_cast %18 : vector<16x8xf32> to vector<16x8x1xf32>
    %20 = vector.broadcast %19 : vector<16x8x1xf32> to vector<16x8x128xf32>
    %21 = arith.mulf %0, %20 : vector<16x8x128xf32>
    %cst_10 = arith.constant dense<0.000000e+00> : vector<16x128xf32>
    %22 = vector.multi_reduction <add>, %21, %cst_10 [1] : vector<16x8x128xf32> to vector<16x128xf32>
    %c0_11 = arith.constant 0 : index
    %c0_12 = arith.constant 0 : index
    %23 = vector.load %arg4[%c0_11, %c0_12] : memref<16x128xf32, #tpu.memory_space<vmem>>, vector<16x128xf32>
    tpu.vector_store %arg4[%c0_11, %c0_12], %22 {strides = array<i32>} : memref<16x128xf32, #tpu.memory_space<vmem>>, vector<16x128xf32>,
    return
  }
  func.func @transform_0(%arg0: i32) -> (i32, i32, i32) {
    %c0_i32 = arith.constant 0 : i32
    %c0_i32_0 = arith.constant 0 : i32
    %c0_i32_1 = arith.constant 0 : i32
    return %arg0, %c0_i32, %c0_i32_0 : i32, i32, i32
  }
  func.func @transform_1(%arg0: i32) -> (i32, i32) {
    %c0_i32 = arith.constant 0 : i32
    %c0_i32_0 = arith.constant 0 : i32
    %c0_i32_1 = arith.constant 0 : i32
    return %c0_i32, %c0_i32_0 : i32, i32
  }
  func.func @transform_2(%arg0: i32) -> (i32, i32, i32) {
    %c0_i32 = arith.constant 0 : i32
    %c0_i32_0 = arith.constant 0 : i32
    %c0_i32_1 = arith.constant 0 : i32
    %c0_i32_2 = arith.constant 0 : i32
    return %c0_i32, %c0_i32_0, %c0_i32_1 : i32, i32, i32
  }
  func.func @transform_3(%arg0: i32) -> (i32, i32) {
    %c0_i32 = arith.constant 0 : i32
    %c0_i32_0 = arith.constant 0 : i32
    return %arg0, %c0_i32 : i32, i32
  }
}

</mosaic_0001>

<llo_original>
// kernel: tpu_custom_call.1
$region0: #{tpu_custom_call.1}
  #allocation0 [shape = 'u32[]', space=smem, size = 0x4, offset = 0x4, fixed_abs, tag = 'smem constant byte address 0x4 - core index']
  #allocation1 [shape = 'u32[144,128]{1,0:T(1,128)}', space=vmem, size = 0x12000, scoped, tag = 'internal scratch']
  %s0 = inlined_call_operand.hbm [shape: f32[16,8,128], index: 0, kind: input, shape index: {}]
  %s1 = inlined_call_operand.hbm [shape: f32[128,256], index: 1, kind: input, shape index: {}]
  %s2 = inlined_call_operand.vmem [shape: f32[1,1,256], index: 2, kind: input, shape index: {}]
  %s3 = inlined_call_operand.hbm [shape: f32[16,128], index: 3, kind: output, shape index: {}]
  %s4 = sld [smem:[#allocation0]]
  $region30: #{tpu_custom_call.1} parent=0
    _
  %s6 = ssub.s32 1, %s4
  %s7 = scalar_select 0, %s6, %s4
  $region1: #{tpu_custom_call.1} parent=0
    #allocation2 [shape = 'u8[65536]{0}', space=vmem, size = 0x10000, scoped, tag = 'input window, operand 0, single buffered']
    #allocation3 [shape = 's32[1]{0}', space=sflag, size = 0x4, scoped, tag = 'scoped memory for tpu_custom_call.1']
    #allocation4 [shape = 's32[1]{0}', space=sflag, size = 0x4, scoped, tag = 'scoped memory for tpu_custom_call.1']
    #allocation5 [shape = 'u8[131072]{0}', space=vmem, size = 0x20000, scoped, tag = 'input window, operand 1, single buffered']
    #allocation6 [shape = 's32[1]{0}', space=sflag, size = 0x4, scoped, tag = 'scoped memory for tpu_custom_call.1']
    #allocation7 [shape = 'u8[8192]{0}', space=vmem, size = 0x2000, scoped, tag = 'output window, operand 0, single buffered']
    %8 = vsyncpa [#allocation3], 0
    %9 = vsyncpa [#allocation6], 0
    %10 = vsyncpa [#allocation4], 0
    // Predicated region
    $region2: #{tpu_custom_call.1} parent=1 // pred_check
      _
    $region3: #{tpu_custom_call.1} parent=1 // pred_check_branch
      %12 = sbr.rel (0) target = $region5
    $region4: #{tpu_custom_call.1} parent=1 // pred_region
      %s14 = ssub.s32 2048, 2048
      %15 = vsyncadd [#allocation3], %s14
      %s16 = sshll.u32 [#allocation2], 4
      %s17 = int_to_ptr.vmem [resolvable:$true] %s16
      %22 = dma.hbm_to_vmem [thread:$0]  %s0, 2048, %s17, [#allocation3], 128, 128, 8
    $region5: #{tpu_custom_call.1} parent=1 // pred_fallthru
      _
    // Predicated region
    $region6: #{tpu_custom_call.1} parent=1 // pred_check
      _
    $region7: #{tpu_custom_call.1} parent=1 // pred_check_branch
      %24 = sbr.rel (0) target = $region9
    $region8: #{tpu_custom_call.1} parent=1 // pred_region
      %s26 = ssub.s32 4096, 4096
      %27 = vsyncadd [#allocation6], %s26
      %s28 = sshll.u32 [#allocation5], 4
      %s29 = int_to_ptr.vmem [resolvable:$true] %s28
      %34 = dma.hbm_to_vmem [thread:$0]  %s1, 4096, %s29, [#allocation6], 256, 256, 16
    $region9: #{tpu_custom_call.1} parent=1 // pred_fallthru
      _
    // Predicated region
    $region10: #{tpu_custom_call.1} parent=1 // pred_check
      _
    $region11: #{tpu_custom_call.1} parent=1 // pred_check_branch
      %36 = sbr.rel (0) target = $region13
    $region12: #{tpu_custom_call.1} parent=1 // pred_region
      _
    $region13: #{tpu_custom_call.1} parent=1 // pred_fallthru
      _
    // Predicated region
    $region14: #{tpu_custom_call.1} parent=1 // pred_check
      _
    $region15: #{tpu_custom_call.1} parent=1 // pred_check_branch
      %38 = sbr.rel (0) target = $region17
    $region16: #{tpu_custom_call.1} parent=1 // pred_region
      %39 = dma.done [#allocation3], 2048
    $region17: #{tpu_custom_call.1} parent=1 // pred_fallthru
      _
    // Predicated region
    $region18: #{tpu_custom_call.1} parent=1 // pred_check
      _
    $region19: #{tpu_custom_call.1} parent=1 // pred_check_branch
      %41 = sbr.rel (0) target = $region21
    $region20: #{tpu_custom_call.1} parent=1 // pred_region
      %42 = dma.done [#allocation6], 4096
    $region21: #{tpu_custom_call.1} parent=1 // pred_fallthru
      _
    %v43 = vld [vmem:[#allocation2] sm:$0xff]
    %v44 = vld [vmem:[#allocation2 + $0x8] sm:$0xff]
    %v45 = vld [vmem:[#allocation2 + $0x10] sm:$0xff]
    %v46 = vld [vmem:[#allocation2 + $0x18] sm:$0xff]
    %v47 = vld [vmem:[#allocation2 + $0x20] sm:$0xff]
    %v48 = vld [vmem:[#allocation2 + $0x28] sm:$0xff]
    %v49 = vld [vmem:[#allocation2 + $0x30] sm:$0xff]
    %v50 = vld [vmem:[#allocation2 + $0x38] sm:$0xff]
    %v51 = vld [vmem:[#allocation2 + $0x40] sm:$0xff]
    %v52 = vld [vmem:[#allocation2 + $0x48] sm:$0xff]
    %v53 = vld [vmem:[#allocation2 + $0x50] sm:$0xff]
    %v54 = vld [vmem:[#allocation2 + $0x58] sm:$0xff]
    %v55 = vld [vmem:[#allocation2 + $0x60] sm:$0xff]
    %v56 = vld [vmem:[#allocation2 + $0x68] sm:$0xff]
    %v57 = vld [vmem:[#allocation2 + $0x70] sm:$0xff]
    %v58 = vld [vmem:[#allocation2 + $0x78] sm:$0xff]
    %v59 = vld [vmem:[#allocation5] sm:$0xff]
    %v60 = vld [vmem:[#allocation5 + $0x8] sm:$0xff]
    %v61 = vld [vmem:[#allocation5 + $0x10] sm:$0xff]
    %v62 = vld [vmem:[#allocation5 + $0x18] sm:$0xff]
    %v63 = vld [vmem:[#allocation5 + $0x20] sm:$0xff]
    %v64 = vld [vmem:[#allocation5 + $0x28] sm:$0xff]
    %v65 = vld [vmem:[#allocation5 + $0x30] sm:$0xff]
    %v66 = vld [vmem:[#allocation5 + $0x38] sm:$0xff]
    %v67 = vld [vmem:[#allocation5 + $0x40] sm:$0xff]
    %v68 = vld [vmem:[#allocation5 + $0x48] sm:$0xff]
    %v69 = vld [vmem:[#allocation5 + $0x50] sm:$0xff]
    %v70 = vld [vmem:[#allocation5 + $0x58] sm:$0xff]
    %v71 = vld [vmem:[#allocation5 + $0x60] sm:$0xff]
    %v72 = vld [vmem:[#allocation5 + $0x68] sm:$0xff]
    %v73 = vld [vmem:[#allocation5 + $0x70] sm:$0xff]
    %v74 = vld [vmem:[#allocation5 + $0x78] sm:$0xff]
    %v75 = vld [vmem:[#allocation5 + $0x80] sm:$0xff]
    %v76 = vld [vmem:[#allocation5 + $0x88] sm:$0xff]
    %v77 = vld [vmem:[#allocation5 + $0x90] sm:$0xff]
    %v78 = vld [vmem:[#allocation5 + $0x98] sm:$0xff]
    %v79 = vld [vmem:[#allocation5 + $0xa0] sm:$0xff]
    %v80 = vld [vmem:[#allocation5 + $0xa8] sm:$0xff]
    %v81 = vld [vmem:[#allocation5 + $0xb0] sm:$0xff]
    %v82 = vld [vmem:[#allocation5 + $0xb8] sm:$0xff]
    %v83 = vld [vmem:[#allocation5 + $0xc0] sm:$0xff]
    %v84 = vld [vmem:[#allocation5 + $0xc8] sm:$0xff]
    %v85 = vld [vmem:[#allocation5 + $0xd0] sm:$0xff]
    %v86 = vld [vmem:[#allocation5 + $0xd8] sm:$0xff]
    %v87 = vld [vmem:[#allocation5 + $0xe0] sm:$0xff]
    %v88 = vld [vmem:[#allocation5 + $0xe8] sm:$0xff]
    %v89 = vld [vmem:[#allocation5 + $0xf0] sm:$0xff]
    %v90 = vld [vmem:[#allocation5 + $0xf8] sm:$0xff]
    %91 = vmatprep.subr.mxu0 %v60
    %92 = vmatpush1.msra.mxu0 %v59
    %93 = vmatprep.subr.mxu0 %v62
    %94 = vmatpush1.msra.mxu0 %v61
    %95 = vmatprep.subr.mxu0 %v64
    %96 = vmatpush1.msra.mxu0 %v63
    %97 = vmatprep.subr.mxu0 %v66
    %98 = vmatpush1.msra.mxu0 %v65
    %99 = vmatprep.subr.mxu0 %v68
    %100 = vmatpush1.msra.mxu0 %v67
    %101 = vmatprep.subr.mxu0 %v70
    %102 = vmatpush1.msra.mxu0 %v69
    %103 = vmatprep.subr.mxu0 %v72
    %104 = vmatpush1.msra.mxu0 %v71
    %105 = vmatprep.subr.mxu0 %v74
    %106 = vmatpush1.msra.mxu0 %v73
    %107 = vmatprep.subr.mxu0 %v76
    %108 = vmatpush1.msra.mxu0 %v75
    %109 = vmatprep.subr.mxu0 %v78
    %110 = vmatpush1.msra.mxu0 %v77
    %111 = vmatprep.subr.mxu0 %v80
    %112 = vmatpush1.msra.mxu0 %v79
    %113 = vmatprep.subr.mxu0 %v82
    %114 = vmatpush1.msra.mxu0 %v81
    %115 = vmatprep.subr.mxu0 %v84
    %116 = vmatpush1.msra.mxu0 %v83
    %117 = vmatprep.subr.mxu0 %v86
    %118 = vmatpush1.msra.mxu0 %v85
    %119 = vmatprep.subr.mxu0 %v88
    %120 = vmatpush1.msra.mxu0 %v87
    %121 = vmatprep.subr.mxu0 %v90
    %122 = vmatpush1.msra.mxu0 %v89
    %123 = vmatprep.subr.mxu0 0.0
    %124 = vmatpush1.msra.mxu0 0.0
    %125 = vmatprep.subr.mxu0 0.0
    %126 = vmatpush1.msra.mxu0 0.0
    %127 = vmatprep.subr.mxu0 0.0
    %128 = vmatpush1.msra.mxu0 0.0
    %129 = vmatprep.subr.mxu0 0.0
    %130 = vmatpush1.msra.mxu0 0.0
    %131 = vmatprep.subr.mxu0 0.0
    %132 = vmatpush1.msra.mxu0 0.0
    %133 = vmatprep.subr.mxu0 0.0
    %134 = vmatpush1.msra.mxu0 0.0
    %135 = vmatprep.subr.mxu0 0.0
    %136 = vmatpush1.msra.mxu0 0.0
    %137 = vmatprep.subr.mxu0 0.0
    %138 = vmatpush1.msra.mxu0 0.0
    %139 = vmatprep.subr.mxu0 0.0
    %140 = vmatpush1.msra.mxu0 0.0
    %141 = vmatprep.subr.mxu0 0.0
    %142 = vmatpush1.msra.mxu0 0.0
    %143 = vmatprep.subr.mxu0 0.0
    %144 = vmatpush1.msra.mxu0 0.0
    %145 = vmatprep.subr.mxu0 0.0
    %146 = vmatpush1.msra.mxu0 0.0
    %147 = vmatprep.subr.mxu0 0.0
    %148 = vmatpush1.msra.mxu0 0.0
    %149 = vmatprep.subr.mxu0 0.0
    %150 = vmatpush1.msra.mxu0 0.0
    %151 = vmatprep.subr.mxu0 0.0
    %152 = vmatpush1.msra.mxu0 0.0
    %153 = vmatprep.subr.mxu0 0.0
    %154 = vmatpush1.msra.mxu0 0.0
    %155 = vmatprep.mubr.f32.mxu0 0.0
    %156 = vmatmul.mubr.f32.gmra.mrb[0].mxu0 %v43
    %v157 = vpop.f32.mrb[0].mxu0
    %v158 = vadd.f32 0.0, %v157
    %v159 = vpop.f32.mrb[0].mxu0
    %v160 = vadd.f32 0.0, %v159
    %161 = vmatprep.mubr.f32.mxu0 0.0
    %162 = vmatmul.mubr.f32.gmra.mrb[0].mxu0 %v44
    %v163 = vpop.f32.mrb[0].mxu0
    %v164 = vadd.f32 0.0, %v163
    %v165 = vpop.f32.mrb[0].mxu0
    %v166 = vadd.f32 0.0, %v165
    %167 = vmatprep.mubr.f32.mxu0 0.0
    %168 = vmatmul.mubr.f32.gmra.mrb[0].mxu0 %v45
    %v169 = vpop.f32.mrb[0].mxu0
    %v170 = vadd.f32 0.0, %v169
    %v171 = vpop.f32.mrb[0].mxu0
    %v172 = vadd.f32 0.0, %v171
    %173 = vmatprep.mubr.f32.mxu0 0.0
    %174 = vmatmul.mubr.f32.gmra.mrb[0].mxu0 %v46
    %v175 = vpop.f32.mrb[0].mxu0
    %v176 = vadd.f32 0.0, %v175
    %v177 = vpop.f32.mrb[0].mxu0
    %v178 = vadd.f32 0.0, %v177
    %179 = vmatprep.mubr.f32.mxu0 0.0
    %180 = vmatmul.mubr.f32.gmra.mrb[0].mxu0 %v47
    %v181 = vpop.f32.mrb[0].mxu0
    %v182 = vadd.f32 0.0, %v181
    %v183 = vpop.f32.mrb[0].mxu0
    %v184 = vadd.f32 0.0, %v183
    %185 = vmatprep.mubr.f32.mxu0 0.0
    %186 = vmatmul.mubr.f32.gmra.mrb[0].mxu0 %v48
    %v187 = vpop.f32.mrb[0].mxu0
    %v188 = vadd.f32 0.0, %v187
    %v189 = vpop.f32.mrb[0].mxu0
    %v190 = vadd.f32 0.0, %v189
    %191 = vmatprep.mubr.f32.mxu0 0.0
    %192 = vmatmul.mubr.f32.gmra.mrb[0].mxu0 %v49
    %v193 = vpop.f32.mrb[0].mxu0
    %v194 = vadd.f32 0.0, %v193
    %v195 = vpop.f32.mrb[0].mxu0
    %v196 = vadd.f32 0.0, %v195
    %197 = vmatprep.mubr.f32.mxu0 0.0
    %198 = vmatmul.mubr.f32.gmra.mrb[0].mxu0 %v50
    %v199 = vpop.f32.mrb[0].mxu0
    %v200 = vadd.f32 0.0, %v199
    %v201 = vpop.f32.mrb[0].mxu0
    %v202 = vadd.f32 0.0, %v201
    %203 = vmatprep.mubr.f32.mxu0 0.0
    %204 = vmatmul.mubr.f32.gmra.mrb[0].mxu0 %v51
    %v205 = vpop.f32.mrb[0].mxu0
    %v206 = vadd.f32 0.0, %v205
    %v207 = vpop.f32.mrb[0].mxu0
    %v208 = vadd.f32 0.0, %v207
    %209 = vmatprep.mubr.f32.mxu0 0.0
    %210 = vmatmul.mubr.f32.gmra.mrb[0].mxu0 %v52
    %v211 = vpop.f32.mrb[0].mxu0
    %v212 = vadd.f32 0.0, %v211
    %v213 = vpop.f32.mrb[0].mxu0
    %v214 = vadd.f32 0.0, %v213
    %215 = vmatprep.mubr.f32.mxu0 0.0
    %216 = vmatmul.mubr.f32.gmra.mrb[0].mxu0 %v53
    %v217 = vpop.f32.mrb[0].mxu0
    %v218 = vadd.f32 0.0, %v217
    %v219 = vpop.f32.mrb[0].mxu0
    %v220 = vadd.f32 0.0, %v219
    %221 = vmatprep.mubr.f32.mxu0 0.0
    %222 = vmatmul.mubr.f32.gmra.mrb[0].mxu0 %v54
    %v223 = vpop.f32.mrb[0].mxu0
    %v224 = vadd.f32 0.0, %v223
    %v225 = vpop.f32.mrb[0].mxu0
    %v226 = vadd.f32 0.0, %v225
    %227 = vmatprep.mubr.f32.mxu0 0.0
    %228 = vmatmul.mubr.f32.gmra.mrb[0].mxu0 %v55
    %v229 = vpop.f32.mrb[0].mxu0
    %v230 = vadd.f32 0.0, %v229
    %v231 = vpop.f32.mrb[0].mxu0
    %v232 = vadd.f32 0.0, %v231
    %233 = vmatprep.mubr.f32.mxu0 0.0
    %234 = vmatmul.mubr.f32.gmra.mrb[0].mxu0 %v56
    %v235 = vpop.f32.mrb[0].mxu0
    %v236 = vadd.f32 0.0, %v235
    %v237 = vpop.f32.mrb[0].mxu0
    %v238 = vadd.f32 0.0, %v237
    %239 = vmatprep.mubr.f32.mxu0 0.0
    %240 = vmatmul.mubr.f32.gmra.mrb[0].mxu0 %v57
    %v241 = vpop.f32.mrb[0].mxu0
    %v242 = vadd.f32 0.0, %v241
    %v243 = vpop.f32.mrb[0].mxu0
    %v244 = vadd.f32 0.0, %v243
    %245 = vmatprep.mubr.f32.mxu0 0.0
    %246 = vmatmul.mubr.f32.gmra.mrb[0].mxu0 %v58
    %v247 = vpop.f32.mrb[0].mxu0
    %v248 = vadd.f32 0.0, %v247
    %v249 = vpop.f32.mrb[0].mxu0
    %v250 = vadd.f32 0.0, %v249
    %251 = vdwg.mxu0
    %v252 = vtanh.pop %v158
    %v253 = vtanh.pop %v160
    %v254 = vtanh.pop %v164
    %v255 = vtanh.pop %v166
    %v256 = vtanh.pop %v170
    %v257 = vtanh.pop %v172
    %v258 = vtanh.pop %v176
    %v259 = vtanh.pop %v178
    %v260 = vtanh.pop %v182
    %v261 = vtanh.pop %v184
    %v262 = vtanh.pop %v188
    %v263 = vtanh.pop %v190
    %v264 = vtanh.pop %v194
    %v265 = vtanh.pop %v196
    %v266 = vtanh.pop %v200
    %v267 = vtanh.pop %v202
    %v268 = vtanh.pop %v206
    %v269 = vtanh.pop %v208
    %v270 = vtanh.pop %v212
    %v271 = vtanh.pop %v214
    %v272 = vtanh.pop %v218
    %v273 = vtanh.pop %v220
    %v274 = vtanh.pop %v224
    %v275 = vtanh.pop %v226
    %v276 = vtanh.pop %v230
    %v277 = vtanh.pop %v232
    %v278 = vtanh.pop %v236
    %v279 = vtanh.pop %v238
    %v280 = vtanh.pop %v242
    %v281 = vtanh.pop %v244
    %v282 = vtanh.pop %v248
    %v283 = vtanh.pop %v250
    %v284 = vld [vmem:[%s2] sm:$0x3]
    %v286 = vlaneseq
    %v287 = vshrl.u32 %v286, 7
    %v288 = vsub.s32 0, %v287
    %v289 = vrot.slane %v284, %v288
    %v290 = vlaneseq
    %v291 = vshrl.u32 %v290, 7
    %v292 = vsub.s32 1, %v291
    %v293 = vrot.slane %v284, %v292
    %v296 = vmul.f32 %v252, %v289
    %v297 = vmul.f32 %v253, %v293
    %v298 = vmul.f32 %v254, %v289
    %v299 = vmul.f32 %v255, %v293
    %v300 = vmul.f32 %v256, %v289
    %v301 = vmul.f32 %v257, %v293
    %v302 = vmul.f32 %v258, %v289
    %v303 = vmul.f32 %v259, %v293
    %v304 = vmul.f32 %v260, %v289
    %v305 = vmul.f32 %v261, %v293
    %v306 = vmul.f32 %v262, %v289
    %v307 = vmul.f32 %v263, %v293
    %v308 = vmul.f32 %v264, %v289
    %v309 = vmul.f32 %v265, %v293
    %v310 = vmul.f32 %v266, %v289
    %v311 = vmul.f32 %v267, %v293
    %v312 = vmul.f32 %v268, %v289
    %v313 = vmul.f32 %v269, %v293
    %v314 = vmul.f32 %v270, %v289
    %v315 = vmul.f32 %v271, %v293
    %v316 = vmul.f32 %v272, %v289
    %v317 = vmul.f32 %v273, %v293
    %v318 = vmul.f32 %v274, %v289
    %v319 = vmul.f32 %v275, %v293
    %v320 = vmul.f32 %v276, %v289
    %v321 = vmul.f32 %v277, %v293
    %v322 = vmul.f32 %v278, %v289
    %v323 = vmul.f32 %v279, %v293
    %v324 = vmul.f32 %v280, %v289
    %v325 = vmul.f32 %v281, %v293
    %v326 = vmul.f32 %v282, %v289
    %v327 = vmul.f32 %v283, %v293
    %v328 = vadd.f32 %v296, %v297
    %329 = vadd.xlane.f32.xlu0 %v328
    %v330 = vpop.xlane.xlu0 %329
    %v331 = vadd.f32 %v298, %v299
    %332 = vadd.xlane.f32.xlu0 %v331
    %v333 = vpop.xlane.xlu0 %332
    %v334 = vadd.f32 %v300, %v301
    %335 = vadd.xlane.f32.xlu0 %v334
    %v336 = vpop.xlane.xlu0 %335
    %v337 = vadd.f32 %v302, %v303
    %338 = vadd.xlane.f32.xlu0 %v337
    %v339 = vpop.xlane.xlu0 %338
    %v340 = vadd.f32 %v304, %v305
    %341 = vadd.xlane.f32.xlu0 %v340
    %v342 = vpop.xlane.xlu0 %341
    %v343 = vadd.f32 %v306, %v307
    %344 = vadd.xlane.f32.xlu0 %v343
    %v345 = vpop.xlane.xlu0 %344
    %v346 = vadd.f32 %v308, %v309
    %347 = vadd.xlane.f32.xlu0 %v346
    %v348 = vpop.xlane.xlu0 %347
    %v349 = vadd.f32 %v310, %v311
    %350 = vadd.xlane.f32.xlu0 %v349
    %v351 = vpop.xlane.xlu0 %350
    %v352 = vadd.f32 %v312, %v313
    %353 = vadd.xlane.f32.xlu0 %v352
    %v354 = vpop.xlane.xlu0 %353
    %v355 = vadd.f32 %v314, %v315
    %356 = vadd.xlane.f32.xlu0 %v355
    %v357 = vpop.xlane.xlu0 %356
    %v358 = vadd.f32 %v316, %v317
    %359 = vadd.xlane.f32.xlu0 %v358
    %v360 = vpop.xlane.xlu0 %359
    %v361 = vadd.f32 %v318, %v319
    %362 = vadd.xlane.f32.xlu0 %v361
    %v363 = vpop.xlane.xlu0 %362
    %v364 = vadd.f32 %v320, %v321
    %365 = vadd.xlane.f32.xlu0 %v364
    %v366 = vpop.xlane.xlu0 %365
    %v367 = vadd.f32 %v322, %v323
    %368 = vadd.xlane.f32.xlu0 %v367
    %v369 = vpop.xlane.xlu0 %368
    %v370 = vadd.f32 %v324, %v325
    %371 = vadd.xlane.f32.xlu0 %v370
    %v372 = vpop.xlane.xlu0 %371
    %v373 = vadd.f32 %v326, %v327
    %374 = vadd.xlane.f32.xlu0 %v373
    %v375 = vpop.xlane.xlu0 %374
    %v392 = vlaneseq
    %v393 = vand.u32 %v392, 127
    %v394 = vlaneseq
    %v395 = vshrl.u32 %v394, 7
    %v396 = vsub.s32 %v393, %v395
    %v397 = vrot.slane %v330, %v396
    %v398 = vlaneseq
    %v399 = vshrl.u32 %v398, 7
    %v400 = vsub.s32 %v393, %v399
    %v401 = vrot.slane %v333, %v400
    %v402 = vlaneseq
    %v403 = vshrl.u32 %v402, 7
    %v404 = vsub.s32 %v393, %v403
    %v405 = vrot.slane %v336, %v404
    %v406 = vlaneseq
    %v407 = vshrl.u32 %v406, 7
    %v408 = vsub.s32 %v393, %v407
    %v409 = vrot.slane %v339, %v408
    %v410 = vlaneseq
    %v411 = vshrl.u32 %v410, 7
    %v412 = vsub.s32 %v393, %v411
    %v413 = vrot.slane %v342, %v412
    %v414 = vlaneseq
    %v415 = vshrl.u32 %v414, 7
    %v416 = vsub.s32 %v393, %v415
    %v417 = vrot.slane %v345, %v416
    %v418 = vlaneseq
    %v419 = vshrl.u32 %v418, 7
    %v420 = vsub.s32 %v393, %v419
    %v421 = vrot.slane %v348, %v420
    %v422 = vlaneseq
    %v423 = vshrl.u32 %v422, 7
    %v424 = vsub.s32 %v393, %v423
    %v425 = vrot.slane %v351, %v424
    %v426 = vlaneseq
    %v427 = vshrl.u32 %v426, 7
    %v428 = vsub.s32 %v393, %v427
    %v429 = vrot.slane %v354, %v428
    %v430 = vlaneseq
    %v431 = vshrl.u32 %v430, 7
    %v432 = vsub.s32 %v393, %v431
    %v433 = vrot.slane %v357, %v432
    %v434 = vlaneseq
    %v435 = vshrl.u32 %v434, 7
    %v436 = vsub.s32 %v393, %v435
    %v437 = vrot.slane %v360, %v436
    %v438 = vlaneseq
    %v439 = vshrl.u32 %v438, 7
    %v440 = vsub.s32 %v393, %v439
    %v441 = vrot.slane %v363, %v440
    %v442 = vlaneseq
    %v443 = vshrl.u32 %v442, 7
    %v444 = vsub.s32 %v393, %v443
    %v445 = vrot.slane %v366, %v444
    %v446 = vlaneseq
    %v447 = vshrl.u32 %v446, 7
    %v448 = vsub.s32 %v393, %v447
    %v449 = vrot.slane %v369, %v448
    %v450 = vlaneseq
    %v451 = vshrl.u32 %v450, 7
    %v452 = vsub.s32 %v393, %v451
    %v453 = vrot.slane %v372, %v452
    %v454 = vlaneseq
    %v455 = vshrl.u32 %v454, 7
    %v456 = vsub.s32 %v393, %v455
    %v457 = vrot.slane %v375, %v456
    %vm458 = vcmask 1041409
    %v459 = vsel %vm458, %v401, %v397
    %vm460 = vcmask 1042434
    %v461 = vsel %vm460, %v405, %v459
    %vm462 = vcmask 1043459
    %v463 = vsel %vm462, %v409, %v461
    %vm464 = vcmask 1044484
    %v465 = vsel %vm464, %v413, %v463
    %vm466 = vcmask 1045509
    %v467 = vsel %vm466, %v417, %v465
    %vm468 = vcmask 1046534
    %v469 = vsel %vm468, %v421, %v467
    %vm470 = vcmask 1047559
    %v471 = vsel %vm470, %v425, %v469
    %v472 = vsel %vm458, %v433, %v429
    %v473 = vsel %vm460, %v437, %v472
    %v474 = vsel %vm462, %v441, %v473
    %v475 = vsel %vm464, %v445, %v474
    %v476 = vsel %vm466, %v449, %v475
    %v477 = vsel %vm468, %v453, %v476
    %v478 = vsel %vm470, %v457, %v477
    %vm481 = vcmask 64512
    %v482 = vsel %vm481, %v471, -inf
    %483 = vmax.xlane.f32.xlu0 %v482
    %v484 = vpop.xlane.xlu0 %483
    %v485 = vsel %vm481, %v478, -inf
    %486 = vmax.xlane.f32.xlu0 %v485
    %v487 = vpop.xlane.xlu0 %486
    %v490 = vlaneseq
    %v491 = vshrl.u32 %v490, 7
    %v492 = vsub.s32 0, %v491
    %v493 = vrot.slane %v484, %v492
    %v494 = vlaneseq
    %v495 = vshrl.u32 %v494, 7
    %v496 = vsub.s32 1, %v495
    %v497 = vrot.slane %v484, %v496
    %v498 = vlaneseq
    %v499 = vshrl.u32 %v498, 7
    %v500 = vsub.s32 2, %v499
    %v501 = vrot.slane %v484, %v500
    %v502 = vlaneseq
    %v503 = vshrl.u32 %v502, 7
    %v504 = vsub.s32 3, %v503
    %v505 = vrot.slane %v484, %v504
    %v506 = vlaneseq
    %v507 = vshrl.u32 %v506, 7
    %v508 = vsub.s32 4, %v507
    %v509 = vrot.slane %v484, %v508
    %v510 = vlaneseq
    %v511 = vshrl.u32 %v510, 7
    %v512 = vsub.s32 5, %v511
    %v513 = vrot.slane %v484, %v512
    %v514 = vlaneseq
    %v515 = vshrl.u32 %v514, 7
    %v516 = vsub.s32 6, %v515
    %v517 = vrot.slane %v484, %v516
    %v518 = vlaneseq
    %v519 = vshrl.u32 %v518, 7
    %v520 = vsub.s32 7, %v519
    %v521 = vrot.slane %v484, %v520
    %v522 = vlaneseq
    %v523 = vshrl.u32 %v522, 7
    %v524 = vsub.s32 0, %v523
    %v525 = vrot.slane %v487, %v524
    %v526 = vlaneseq
    %v527 = vshrl.u32 %v526, 7
    %v528 = vsub.s32 1, %v527
    %v529 = vrot.slane %v487, %v528
    %v530 = vlaneseq
    %v531 = vshrl.u32 %v530, 7
    %v532 = vsub.s32 2, %v531
    %v533 = vrot.slane %v487, %v532
    %v534 = vlaneseq
    %v535 = vshrl.u32 %v534, 7
    %v536 = vsub.s32 3, %v535
    %v537 = vrot.slane %v487, %v536
    %v538 = vlaneseq
    %v539 = vshrl.u32 %v538, 7
    %v540 = vsub.s32 4, %v539
    %v541 = vrot.slane %v487, %v540
    %v542 = vlaneseq
    %v543 = vshrl.u32 %v542, 7
    %v544 = vsub.s32 5, %v543
    %v545 = vrot.slane %v487, %v544
    %v546 = vlaneseq
    %v547 = vshrl.u32 %v546, 7
    %v548 = vsub.s32 6, %v547
    %v549 = vrot.slane %v487, %v548
    %v550 = vlaneseq
    %v551 = vshrl.u32 %v550, 7
    %v552 = vsub.s32 7, %v551
    %v553 = vrot.slane %v487, %v552
    %v570 = vsub.f32 %v330, %v493
    %v571 = vsub.f32 %v333, %v497
    %v572 = vsub.f32 %v336, %v501
    %v573 = vsub.f32 %v339, %v505
    %v574 = vsub.f32 %v342, %v509
    %v575 = vsub.f32 %v345, %v513
    %v576 = vsub.f32 %v348, %v517
    %v577 = vsub.f32 %v351, %v521
    %v578 = vsub.f32 %v354, %v525
    %v579 = vsub.f32 %v357, %v529
    %v580 = vsub.f32 %v360, %v533
    %v581 = vsub.f32 %v363, %v537
    %v582 = vsub.f32 %v366, %v541
    %v583 = vsub.f32 %v369, %v545
    %v584 = vsub.f32 %v372, %v549
    %v585 = vsub.f32 %v375, %v553
    %v586 = vmul.f32 %v570, 1.442695
    %v587 = vpow.pop %v586
    %v588 = vmul.f32 %v571, 1.442695
    %v589 = vpow.pop %v588
    %v590 = vmul.f32 %v572, 1.442695
    %v591 = vpow.pop %v590
    %v592 = vmul.f32 %v573, 1.442695
    %v593 = vpow.pop %v592
    %v594 = vmul.f32 %v574, 1.442695
    %v595 = vpow.pop %v594
    %v596 = vmul.f32 %v575, 1.442695
    %v597 = vpow.pop %v596
    %v598 = vmul.f32 %v576, 1.442695
    %v599 = vpow.pop %v598
    %v600 = vmul.f32 %v577, 1.442695
    %v601 = vpow.pop %v600
    %v602 = vmul.f32 %v578, 1.442695
    %v603 = vpow.pop %v602
    %v604 = vmul.f32 %v579, 1.442695
    %v605 = vpow.pop %v604
    %v606 = vmul.f32 %v580, 1.442695
    %v607 = vpow.pop %v606
    %v608 = vmul.f32 %v581, 1.442695
    %v609 = vpow.pop %v608
    %v610 = vmul.f32 %v582, 1.442695
    %v611 = vpow.pop %v610
    %v612 = vmul.f32 %v583, 1.442695
    %v613 = vpow.pop %v612
    %v614 = vmul.f32 %v584, 1.442695
    %v615 = vpow.pop %v614
    %v616 = vmul.f32 %v585, 1.442695
    %v617 = vpow.pop %v616
    %634 = vset.pattern.permute.xlu0 0
    %635 = vperm.xlu0 %634, %v587
    %v636 = vpop.permute.xlu0 %635
    %637 = vset.pattern.permute.xlu0 0
    %638 = vperm.xlu0 %637, %v589
    %v639 = vpop.permute.xlu0 %638
    %640 = vset.pattern.permute.xlu0 0
    %641 = vperm.xlu0 %640, %v591
    %v642 = vpop.permute.xlu0 %641
    %643 = vset.pattern.permute.xlu0 0
    %644 = vperm.xlu0 %643, %v593
    %v645 = vpop.permute.xlu0 %644
    %646 = vset.pattern.permute.xlu0 0
    %647 = vperm.xlu0 %646, %v595
    %v648 = vpop.permute.xlu0 %647
    %649 = vset.pattern.permute.xlu0 0
    %650 = vperm.xlu0 %649, %v597
    %v651 = vpop.permute.xlu0 %650
    %652 = vset.pattern.permute.xlu0 0
    %653 = vperm.xlu0 %652, %v599
    %v654 = vpop.permute.xlu0 %653
    %655 = vset.pattern.permute.xlu0 0
    %656 = vperm.xlu0 %655, %v601
    %v657 = vpop.permute.xlu0 %656
    %658 = vset.pattern.permute.xlu0 0
    %659 = vperm.xlu0 %658, %v603
    %v660 = vpop.permute.xlu0 %659
    %661 = vset.pattern.permute.xlu0 0
    %662 = vperm.xlu0 %661, %v605
    %v663 = vpop.permute.xlu0 %662
    %664 = vset.pattern.permute.xlu0 0
    %665 = vperm.xlu0 %664, %v607
    %v666 = vpop.permute.xlu0 %665
    %667 = vset.pattern.permute.xlu0 0
    %668 = vperm.xlu0 %667, %v609
    %v669 = vpop.permute.xlu0 %668
    %670 = vset.pattern.permute.xlu0 0
    %671 = vperm.xlu0 %670, %v611
    %v672 = vpop.permute.xlu0 %671
    %673 = vset.pattern.permute.xlu0 0
    %674 = vperm.xlu0 %673, %v613
    %v675 = vpop.permute.xlu0 %674
    %676 = vset.pattern.permute.xlu0 0
    %677 = vperm.xlu0 %676, %v615
    %v678 = vpop.permute.xlu0 %677
    %679 = vset.pattern.permute.xlu0 0
    %680 = vperm.xlu0 %679, %v617
    %v681 = vpop.permute.xlu0 %680
    %v682 = vlaneseq
    %v683 = vshrl.u32 %v682, 7
    %v684 = vsub.s32 %v393, %v683
    %v685 = vrot.slane %v636, %v684
    %v686 = vlaneseq
    %v687 = vshrl.u32 %v686, 7
    %v688 = vsub.s32 %v393, %v687
    %v689 = vrot.slane %v639, %v688
    %v690 = vlaneseq
    %v691 = vshrl.u32 %v690, 7
    %v692 = vsub.s32 %v393, %v691
    %v693 = vrot.slane %v642, %v692
    %v694 = vlaneseq
    %v695 = vshrl.u32 %v694, 7
    %v696 = vsub.s32 %v393, %v695
    %v697 = vrot.slane %v645, %v696
    %v698 = vlaneseq
    %v699 = vshrl.u32 %v698, 7
    %v700 = vsub.s32 %v393, %v699
    %v701 = vrot.slane %v648, %v700
    %v702 = vlaneseq
    %v703 = vshrl.u32 %v702, 7
    %v704 = vsub.s32 %v393, %v703
    %v705 = vrot.slane %v651, %v704
    %v706 = vlaneseq
    %v707 = vshrl.u32 %v706, 7
    %v708 = vsub.s32 %v393, %v707
    %v709 = vrot.slane %v654, %v708
    %v710 = vlaneseq
    %v711 = vshrl.u32 %v710, 7
    %v712 = vsub.s32 %v393, %v711
    %v713 = vrot.slane %v657, %v712
    %v714 = vlaneseq
    %v715 = vshrl.u32 %v714, 7
    %v716 = vsub.s32 %v393, %v715
    %v717 = vrot.slane %v660, %v716
    %v718 = vlaneseq
    %v719 = vshrl.u32 %v718, 7
    %v720 = vsub.s32 %v393, %v719
    %v721 = vrot.slane %v663, %v720
    %v722 = vlaneseq
    %v723 = vshrl.u32 %v722, 7
    %v724 = vsub.s32 %v393, %v723
    %v725 = vrot.slane %v666, %v724
    %v726 = vlaneseq
    %v727 = vshrl.u32 %v726, 7
    %v728 = vsub.s32 %v393, %v727
    %v729 = vrot.slane %v669, %v728
    %v730 = vlaneseq
    %v731 = vshrl.u32 %v730, 7
    %v732 = vsub.s32 %v393, %v731
    %v733 = vrot.slane %v672, %v732
    %v734 = vlaneseq
    %v735 = vshrl.u32 %v734, 7
    %v736 = vsub.s32 %v393, %v735
    %v737 = vrot.slane %v675, %v736
    %v738 = vlaneseq
    %v739 = vshrl.u32 %v738, 7
    %v740 = vsub.s32 %v393, %v739
    %v741 = vrot.slane %v678, %v740
    %v742 = vlaneseq
    %v743 = vshrl.u32 %v742, 7
    %v744 = vsub.s32 %v393, %v743
    %v745 = vrot.slane %v681, %v744
    %v746 = vsel %vm458, %v689, %v685
    %v747 = vsel %vm460, %v693, %v746
    %v748 = vsel %vm462, %v697, %v747
    %v749 = vsel %vm464, %v701, %v748
    %v750 = vsel %vm466, %v705, %v749
    %v751 = vsel %vm468, %v709, %v750
    %v752 = vsel %vm470, %v713, %v751
    %v753 = vsel %vm458, %v721, %v717
    %v754 = vsel %vm460, %v725, %v753
    %v755 = vsel %vm462, %v729, %v754
    %v756 = vsel %vm464, %v733, %v755
    %v757 = vsel %vm466, %v737, %v756
    %v758 = vsel %vm468, %v741, %v757
    %v759 = vsel %vm470, %v745, %v758
    %v762 = vsel %vm481, %v752, 0.0
    %763 = vadd.xlane.f32.xlu0 %v762
    %v764 = vpop.xlane.xlu0 %763
    %v765 = vsel %vm481, %v759, 0.0
    %766 = vadd.xlane.f32.xlu0 %v765
    %v767 = vpop.xlane.xlu0 %766
    %v770 = vlaneseq
    %v771 = vshrl.u32 %v770, 7
    %v772 = vsub.s32 0, %v771
    %v773 = vrot.slane %v764, %v772
    %v774 = vlaneseq
    %v775 = vshrl.u32 %v774, 7
    %v776 = vsub.s32 1, %v775
    %v777 = vrot.slane %v764, %v776
    %v778 = vlaneseq
    %v779 = vshrl.u32 %v778, 7
    %v780 = vsub.s32 2, %v779
    %v781 = vrot.slane %v764, %v780
    %v782 = vlaneseq
    %v783 = vshrl.u32 %v782, 7
    %v784 = vsub.s32 3, %v783
    %v785 = vrot.slane %v764, %v784
    %v786 = vlaneseq
    %v787 = vshrl.u32 %v786, 7
    %v788 = vsub.s32 4, %v787
    %v789 = vrot.slane %v764, %v788
    %v790 = vlaneseq
    %v791 = vshrl.u32 %v790, 7
    %v792 = vsub.s32 5, %v791
    %v793 = vrot.slane %v764, %v792
    %v794 = vlaneseq
    %v795 = vshrl.u32 %v794, 7
    %v796 = vsub.s32 6, %v795
    %v797 = vrot.slane %v764, %v796
    %v798 = vlaneseq
    %v799 = vshrl.u32 %v798, 7
    %v800 = vsub.s32 7, %v799
    %v801 = vrot.slane %v764, %v800
    %v802 = vlaneseq
    %v803 = vshrl.u32 %v802, 7
    %v804 = vsub.s32 0, %v803
    %v805 = vrot.slane %v767, %v804
    %v806 = vlaneseq
    %v807 = vshrl.u32 %v806, 7
    %v808 = vsub.s32 1, %v807
    %v809 = vrot.slane %v767, %v808
    %v810 = vlaneseq
    %v811 = vshrl.u32 %v810, 7
    %v812 = vsub.s32 2, %v811
    %v813 = vrot.slane %v767, %v812
    %v814 = vlaneseq
    %v815 = vshrl.u32 %v814, 7
    %v816 = vsub.s32 3, %v815
    %v817 = vrot.slane %v767, %v816
    %v818 = vlaneseq
    %v819 = vshrl.u32 %v818, 7
    %v820 = vsub.s32 4, %v819
    %v821 = vrot.slane %v767, %v820
    %v822 = vlaneseq
    %v823 = vshrl.u32 %v822, 7
    %v824 = vsub.s32 5, %v823
    %v825 = vrot.slane %v767, %v824
    %v826 = vlaneseq
    %v827 = vshrl.u32 %v826, 7
    %v828 = vsub.s32 6, %v827
    %v829 = vrot.slane %v767, %v828
    %v830 = vlaneseq
    %v831 = vshrl.u32 %v830, 7
    %v832 = vsub.s32 7, %v831
    %v833 = vrot.slane %v767, %v832
    %v850 = vrcp.pop %v773
    %v851 = vmul.f32 %v587, %v850
    %v852 = vrcp.pop %v777
    %v853 = vmul.f32 %v589, %v852
    %v854 = vrcp.pop %v781
    %v855 = vmul.f32 %v591, %v854
    %v856 = vrcp.pop %v785
    %v857 = vmul.f32 %v593, %v856
    %v858 = vrcp.pop %v789
    %v859 = vmul.f32 %v595, %v858
    %v860 = vrcp.pop %v793
    %v861 = vmul.f32 %v597, %v860
    %v862 = vrcp.pop %v797
    %v863 = vmul.f32 %v599, %v862
    %v864 = vrcp.pop %v801
    %v865 = vmul.f32 %v601, %v864
    %v866 = vrcp.pop %v805
    %v867 = vmul.f32 %v603, %v866
    %v868 = vrcp.pop %v809
    %v869 = vmul.f32 %v605, %v868
    %v870 = vrcp.pop %v813
    %v871 = vmul.f32 %v607, %v870
    %v872 = vrcp.pop %v817
    %v873 = vmul.f32 %v609, %v872
    %v874 = vrcp.pop %v821
    %v875 = vmul.f32 %v611, %v874
    %v876 = vrcp.pop %v825
    %v877 = vmul.f32 %v613, %v876
    %v878 = vrcp.pop %v829
    %v879 = vmul.f32 %v615, %v878
    %v880 = vrcp.pop %v833
    %v881 = vmul.f32 %v617, %v880
    %883 = vset.pattern.permute.xlu0 0
    %884 = vperm.xlu0 %883, %v851
    %v885 = vpop.permute.xlu0 %884
    %888 = vset.pattern.permute.xlu0 0
    %889 = vperm.xlu0 %888, %v853
    %v890 = vpop.permute.xlu0 %889
    %893 = vset.pattern.permute.xlu0 0
    %894 = vperm.xlu0 %893, %v855
    %v895 = vpop.permute.xlu0 %894
    %898 = vset.pattern.permute.xlu0 0
    %899 = vperm.xlu0 %898, %v857
    %v900 = vpop.permute.xlu0 %899
    %903 = vset.pattern.permute.xlu0 0
    %904 = vperm.xlu0 %903, %v859
    %v905 = vpop.permute.xlu0 %904
    %908 = vset.pattern.permute.xlu0 0
    %909 = vperm.xlu0 %908, %v861
    %v910 = vpop.permute.xlu0 %909
    %913 = vset.pattern.permute.xlu0 0
    %914 = vperm.xlu0 %913, %v863
    %v915 = vpop.permute.xlu0 %914
    %918 = vset.pattern.permute.xlu0 0
    %919 = vperm.xlu0 %918, %v865
    %v920 = vpop.permute.xlu0 %919
    %923 = vset.pattern.permute.xlu0 0
    %924 = vperm.xlu0 %923, %v867
    %v925 = vpop.permute.xlu0 %924
    %928 = vset.pattern.permute.xlu0 0
    %929 = vperm.xlu0 %928, %v869
    %v930 = vpop.permute.xlu0 %929
    %933 = vset.pattern.permute.xlu0 0
    %934 = vperm.xlu0 %933, %v871
    %v935 = vpop.permute.xlu0 %934
    %938 = vset.pattern.permute.xlu0 0
    %939 = vperm.xlu0 %938, %v873
    %v940 = vpop.permute.xlu0 %939
    %943 = vset.pattern.permute.xlu0 0
    %944 = vperm.xlu0 %943, %v875
    %v945 = vpop.permute.xlu0 %944
    %948 = vset.pattern.permute.xlu0 0
    %949 = vperm.xlu0 %948, %v877
    %v950 = vpop.permute.xlu0 %949
    %953 = vset.pattern.permute.xlu0 0
    %954 = vperm.xlu0 %953, %v879
    %v955 = vpop.permute.xlu0 %954
    %958 = vset.pattern.permute.xlu0 0
    %959 = vperm.xlu0 %958, %v881
    %v960 = vpop.permute.xlu0 %959
    %v962 = vmul.f32 %v43, %v885
    %v963 = vmul.f32 %v44, %v890
    %v964 = vmul.f32 %v45, %v895
    %v965 = vmul.f32 %v46, %v900
    %v966 = vmul.f32 %v47, %v905
    %v967 = vmul.f32 %v48, %v910
    %v968 = vmul.f32 %v49, %v915
    %v969 = vmul.f32 %v50, %v920
    %v970 = vmul.f32 %v51, %v925
    %v971 = vmul.f32 %v52, %v930
    %v972 = vmul.f32 %v53, %v935
    %v973 = vmul.f32 %v54, %v940
    %v974 = vmul.f32 %v55, %v945
    %v975 = vmul.f32 %v56, %v950
    %v976 = vmul.f32 %v57, %v955
    %v977 = vmul.f32 %v58, %v960
    %v978 = vrot.slane %v962, 4
    %v979 = vadd.f32 %v962, %v978
    %v980 = vrot.slane %v979, 2
    %v981 = vadd.f32 %v979, %v980
    %v982 = vrot.slane %v981, 1
    %v983 = vadd.f32 %v981, %v982
    %v984 = vrot.slane %v963, 4
    %v985 = vadd.f32 %v963, %v984
    %v986 = vrot.slane %v985, 2
    %v987 = vadd.f32 %v985, %v986
    %v988 = vrot.slane %v987, 1
    %v989 = vadd.f32 %v987, %v988
    %v990 = vrot.slane %v964, 4
    %v991 = vadd.f32 %v964, %v990
    %v992 = vrot.slane %v991, 2
    %v993 = vadd.f32 %v991, %v992
    %v994 = vrot.slane %v993, 1
    %v995 = vadd.f32 %v993, %v994
    %v996 = vrot.slane %v965, 4
    %v997 = vadd.f32 %v965, %v996
    %v998 = vrot.slane %v997, 2
    %v999 = vadd.f32 %v997, %v998
    %v1000 = vrot.slane %v999, 1
    %v1001 = vadd.f32 %v999, %v1000
    %v1002 = vrot.slane %v966, 4
    %v1003 = vadd.f32 %v966, %v1002
    %v1004 = vrot.slane %v1003, 2
    %v1005 = vadd.f32 %v1003, %v1004
    %v1006 = vrot.slane %v1005, 1
    %v1007 = vadd.f32 %v1005, %v1006
    %v1008 = vrot.slane %v967, 4
    %v1009 = vadd.f32 %v967, %v1008
    %v1010 = vrot.slane %v1009, 2
    %v1011 = vadd.f32 %v1009, %v1010
    %v1012 = vrot.slane %v1011, 1
    %v1013 = vadd.f32 %v1011, %v1012
    %v1014 = vrot.slane %v968, 4
    %v1015 = vadd.f32 %v968, %v1014
    %v1016 = vrot.slane %v1015, 2
    %v1017 = vadd.f32 %v1015, %v1016
    %v1018 = vrot.slane %v1017, 1
    %v1019 = vadd.f32 %v1017, %v1018
    %v1020 = vrot.slane %v969, 4
    %v1021 = vadd.f32 %v969, %v1020
    %v1022 = vrot.slane %v1021, 2
    %v1023 = vadd.f32 %v1021, %v1022
    %v1024 = vrot.slane %v1023, 1
    %v1025 = vadd.f32 %v1023, %v1024
    %v1026 = vrot.slane %v970, 4
    %v1027 = vadd.f32 %v970, %v1026
    %v1028 = vrot.slane %v1027, 2
    %v1029 = vadd.f32 %v1027, %v1028
    %v1030 = vrot.slane %v1029, 1
    %v1031 = vadd.f32 %v1029, %v1030
    %v1032 = vrot.slane %v971, 4
    %v1033 = vadd.f32 %v971, %v1032
    %v1034 = vrot.slane %v1033, 2
    %v1035 = vadd.f32 %v1033, %v1034
    %v1036 = vrot.slane %v1035, 1
    %v1037 = vadd.f32 %v1035, %v1036
    %v1038 = vrot.slane %v972, 4
    %v1039 = vadd.f32 %v972, %v1038
    %v1040 = vrot.slane %v1039, 2
    %v1041 = vadd.f32 %v1039, %v1040
    %v1042 = vrot.slane %v1041, 1
    %v1043 = vadd.f32 %v1041, %v1042
    %v1044 = vrot.slane %v973, 4
    %v1045 = vadd.f32 %v973, %v1044
    %v1046 = vrot.slane %v1045, 2
    %v1047 = vadd.f32 %v1045, %v1046
    %v1048 = vrot.slane %v1047, 1
    %v1049 = vadd.f32 %v1047, %v1048
    %v1050 = vrot.slane %v974, 4
    %v1051 = vadd.f32 %v974, %v1050
    %v1052 = vrot.slane %v1051, 2
    %v1053 = vadd.f32 %v1051, %v1052
    %v1054 = vrot.slane %v1053, 1
    %v1055 = vadd.f32 %v1053, %v1054
    %v1056 = vrot.slane %v975, 4
    %v1057 = vadd.f32 %v975, %v1056
    %v1058 = vrot.slane %v1057, 2
    %v1059 = vadd.f32 %v1057, %v1058
    %v1060 = vrot.slane %v1059, 1
    %v1061 = vadd.f32 %v1059, %v1060
    %v1062 = vrot.slane %v976, 4
    %v1063 = vadd.f32 %v976, %v1062
    %v1064 = vrot.slane %v1063, 2
    %v1065 = vadd.f32 %v1063, %v1064
    %v1066 = vrot.slane %v1065, 1
    %v1067 = vadd.f32 %v1065, %v1066
    %v1068 = vrot.slane %v977, 4
    %v1069 = vadd.f32 %v977, %v1068
    %v1070 = vrot.slane %v1069, 2
    %v1071 = vadd.f32 %v1069, %v1070
    %v1072 = vrot.slane %v1071, 1
    %v1073 = vadd.f32 %v1071, %v1072
    %v1090 = vsel %vm458, %v989, %v983
    %v1091 = vsel %vm460, %v995, %v1090
    %v1092 = vsel %vm462, %v1001, %v1091
    %v1093 = vsel %vm464, %v1007, %v1092
    %v1094 = vsel %vm466, %v1013, %v1093
    %v1095 = vsel %vm468, %v1019, %v1094
    %v1096 = vsel %vm470, %v1025, %v1095
    %v1097 = vsel %vm458, %v1037, %v1031
    %v1098 = vsel %vm460, %v1043, %v1097
    %v1099 = vsel %vm462, %v1049, %v1098
    %v1100 = vsel %vm464, %v1055, %v1099
    %v1101 = vsel %vm466, %v1061, %v1100
    %v1102 = vsel %vm468, %v1067, %v1101
    %v1103 = vsel %vm470, %v1073, %v1102
    %1106 = vst [vmem:[#allocation7] sm:$0xff] %v1096
    %1107 = vst [vmem:[#allocation7 + $0x8] sm:$0xff] %v1103
    // Predicated region
    $region22: #{tpu_custom_call.1} parent=1 // pred_check
      _
    $region23: #{tpu_custom_call.1} parent=1 // pred_check_branch
      %1109 = sbr.rel (0) target = $region25
    $region24: #{tpu_custom_call.1} parent=1 // pred_region
      %s1111 = ssub.s32 256, 256
      %1112 = vsyncadd [#allocation4], %s1111
      %s1113 = sshll.u32 [#allocation7], 4
      %s1114 = int_to_ptr.vmem [resolvable:$true] %s1113
      %1119 = dma.vmem_to_hbm [thread:$0]  %s1114, 256, %s3, [#allocation4], 128, 128, 8
    $region25: #{tpu_custom_call.1} parent=1 // pred_fallthru
      _
    // Predicated region
    $region26: #{tpu_custom_call.1} parent=1 // pred_check
      _
    $region27: #{tpu_custom_call.1} parent=1 // pred_check_branch
      %1121 = sbr.rel (0) target = $region29
    $region28: #{tpu_custom_call.1} parent=1 // pred_region
      %1122 = dma.done [#allocation4], 256
    $region29: #{tpu_custom_call.1} parent=1 // pred_fallthru
      _
    %1123 = vsyncpa [#allocation3], 1
    %1124 = vsyncpa [#allocation6], 1
    %1125 = vsyncpa [#allocation4], 1

</llo_original>
